<compile_context>
chip_gen: v6e
topology: v6e:2x2x1
jax: 0.10.0
libtpu: 0.0.40
codegen_flags: <defaults>
</compile_context>

<pallas_src>
import numpy as np
import jax
import jax.numpy as jnp
from jax import lax
from jax.experimental import pallas as pl
from jax.experimental.pallas import tpu as pltpu


def _seq_att_kernel(offs_ref, lens_ref,                 # scalar prefetch (SMEM)
                    x_ref, w1_ref, w2r_ref, wr_ref,     # VMEM inputs
                    packed_ref):                        # VMEM output (S, LANES)
    t_total, emb = x_ref.shape
    n_seg = lens_ref.shape[0]
    sh = w2r_ref.shape[1]                 # S * H (w2 pre-tiled across segments on the host)
    n_heads = sh // n_seg
    lanes = packed_ref.shape[1]

    x_f32 = x_ref[...]                                   # (T, E) f32 (exact path for the mean)
    x_b16 = x_f32.astype(jnp.bfloat16)

    # --- attention logits for ALL segments in batched (T, S*H) column layout ---
    hid = jnp.maximum(
        jnp.dot(x_b16, w1_ref[...], preferred_element_type=jnp.float32), 0.0)    # (T, A)
    logits = jnp.dot(hid.astype(jnp.bfloat16), w2r_ref[...],
                     preferred_element_type=jnp.float32)                         # (T, S*H)

    # --- per-column segment masks: iota + select chain over the SMEM scalars ---
    t_idx = lax.broadcasted_iota(jnp.int32, (t_total, sh), 0)
    c_idx = lax.broadcasted_iota(jnp.int32, (t_total, sh), 1)
    start_b = jnp.full((t_total, sh), offs_ref[0], jnp.int32)
    len_b = jnp.full((t_total, sh), lens_ref[0], jnp.int32)
    for s in range(1, n_seg):             # ascending overwrite: column c>=s*H gets segment s
        sel = c_idx >= s * n_heads
        start_b = jnp.where(sel, offs_ref[s], start_b)
        len_b = jnp.where(sel, lens_ref[s], len_b)
    mask = (t_idx >= start_b) & (t_idx < start_b + len_b)                         # (T, S*H)

    # --- masked softmax over time for all segments/heads at once (f32) ---
    lg = jnp.where(mask, logits, jnp.float32(-1e30))
    m = jnp.max(lg, axis=0, keepdims=True)                                        # (1, S*H)
    ex = jnp.where(mask, jnp.exp(lg - m), 0.0)                                    # (T, S*H)
    denom = jnp.sum(ex, axis=0, keepdims=True)
    attn = ex * pl.reciprocal(jnp.maximum(denom, jnp.float32(1e-30)), approx=True)
    attn_b16 = attn.astype(jnp.bfloat16)

    # --- batched contractions: one matmul each instead of one per segment ---
    # v_all[s*H+h, :] = attn_s[:, h]^T @ x ; gram_all diagonal HxH blocks = attn_s^T @ attn_s
    v_all = lax.dot_general(attn_b16, x_b16, (((0,), (0,)), ((), ())),
                            preferred_element_type=jnp.float32)                   # (S*H, E)
    gram_all = lax.dot_general(attn_b16, attn_b16, (((0,), (0,)), ((), ())),
                               preferred_element_type=jnp.float32)                # (S*H, S*H)

    # --- segment means: one (S, T) normalized-mask @ (T, E) matmul, kept f32 for accuracy ---
    s_idx = lax.broadcasted_iota(jnp.int32, (n_seg, t_total), 0)
    tt = lax.broadcasted_iota(jnp.int32, (n_seg, t_total), 1)
    start_m = jnp.full((n_seg, t_total), offs_ref[0], jnp.int32)
    len_m = jnp.full((n_seg, t_total), lens_ref[0], jnp.int32)
    inv_m = jnp.full((n_seg, t_total),
                     1.0 / jnp.maximum(lens_ref[0].astype(jnp.float32), 1.0), jnp.float32)
    for s in range(1, n_seg):
        sel = s_idx == s
        start_m = jnp.where(sel, offs_ref[s], start_m)
        len_m = jnp.where(sel, lens_ref[s], len_m)
        inv_m = jnp.where(sel, 1.0 / jnp.maximum(lens_ref[s].astype(jnp.float32), 1.0), inv_m)
    mask_mean = jnp.where((tt >= start_m) & (tt < start_m + len_m), inv_m, 0.0)   # (S, T)
    seg_mean = lax.dot_general(mask_mean, x_f32, (((1,), (0,)), ((), ())),
                               preferred_element_type=jnp.float32)                # (S, E)

    # --- post_fc for ALL segments as one K = H*E matmul; operand assembled in registers ---
    vflat = jnp.concatenate(
        [jnp.concatenate([v_all[s * n_heads + h: s * n_heads + h + 1, :]
                          for h in range(n_heads)], axis=1)                       # (1, H*E)
         for s in range(n_seg)], axis=0)                                          # (S, H*E)
    out_all = jnp.dot(vflat.astype(jnp.bfloat16), wr_ref[...],
                      preferred_element_type=jnp.float32)                         # (S, E)

    # --- gram diagonal blocks, flattened row-major in registers ---
    gram_flat = jnp.concatenate(
        [jnp.concatenate([gram_all[s * n_heads + h: s * n_heads + h + 1,
                                   s * n_heads: s * n_heads + n_heads]
                          for h in range(n_heads)], axis=1)                       # (1, H*H)
         for s in range(n_seg)], axis=0)                                          # (S, H*H)

    # --- ONE lane-dense store of the whole packed (S, LANES) block ---
    pad_w = lanes - (2 * emb + n_heads * n_heads)
    pieces = [out_all, seg_mean, gram_flat]
    if pad_w > 0:
        pieces.append(jnp.zeros((n_seg, pad_w), jnp.float32))
    packed_ref[...] = jnp.concatenate(pieces, axis=1)


def seq_attention_multi(x, seg_lens, w1, w2, wpost_t):
    """x: (T, E); seg_lens: (S,) int; w1: (E, A); w2: (A, H); wpost_t: (E*H, E)."""
    T, E = x.shape
    A = w1.shape[1]
    H = w2.shape[1]
    S = seg_lens.shape[0]

    seg_lens = seg_lens.astype(jnp.int32)
    offs = jnp.concatenate(
        [jnp.zeros((1,), jnp.int32), jnp.cumsum(seg_lens)[:-1]]).astype(jnp.int32)

    # One-time host-side re-layout of post_fc so the in-kernel head-major flatten of
    # v = attn^T @ x matches torch's row-major flatten of x^T @ attn:
    #   wr[h*E + e, :] = wpost_t[e*H + h, :]   =>   vflat @ wr == vec(x^T attn) @ wpost_t
    wr = wpost_t.reshape(E, H, E).transpose(1, 0, 2).reshape(H * E, E)

    # w2 tiled S times along the head axis so logits are produced directly in the batched
    # (T, S*H) column layout (free while S*H <= 128: still a single MXU pass).
    w2_rep = jnp.tile(w2, (1, S))

    # bf16 MXU operands (accumulation stays f32 inside the kernel).
    w1b = w1.astype(jnp.bfloat16)
    w2b = w2_rep.astype(jnp.bfloat16)
    wrb = wr.astype(jnp.bfloat16)

    LANES = max(128, ((2 * E + H * H + 127) // 128) * 128)   # packed, lane-dense output row

    grid_spec = pltpu.PrefetchScalarGridSpec(
        num_scalar_prefetch=2,
        grid=(1,),
        in_specs=[
            pl.BlockSpec((T, E), lambda i, offs, lens: (0, 0)),
            pl.BlockSpec((E, A), lambda i, offs, lens: (0, 0)),
            pl.BlockSpec((A, S * H), lambda i, offs, lens: (0, 0)),
            pl.BlockSpec((H * E, E), lambda i, offs, lens: (0, 0)),
        ],
        out_specs=pl.BlockSpec((S, LANES), lambda i, offs, lens: (0, 0)),
    )

    packed = pl.pallas_call(
        _seq_att_kernel,
        out_shape=jax.ShapeDtypeStruct((S, LANES), jnp.float32),
        grid_spec=grid_spec,
        compiler_params=pltpu.CompilerParams(
            # grid=(1,): one step on one TensorCore — no megacore sharding to be had at this
            # size; a real parallel axis only pays off if T/S grow substantially.
            dimension_semantics=("arbitrary",),
            vmem_limit_bytes=32 * 1024 * 1024,   # far above actual use; portable v5e/v6e/v7x
        ),
    )(offs, seg_lens, x, w1b, w2b, wrb)

    out = packed[:, :E]
    seg = packed[:, E:2 * E]
    gram = packed[:, 2 * E:2 * E + H * H].reshape(S, H, H)
    return out, seg, gram


def _reference(x, seg_lens, w1, w2, wpost_t):
    """Pure-JAX (f32) mirror of the PyTorch forward (multi_attention + average segments)."""
    outs, segs, grams = [], [], []
    start = 0
    for n in np.asarray(seg_lens):
        n = int(n)
        xi = x[start:start + n]
        start += n
        logits = jnp.maximum(xi @ w1, 0.0) @ w2
        attn = jax.nn.softmax(logits, axis=0)
        out_mat = xi.T @ attn                       # (E, H)
        out = out_mat.reshape(-1) @ wpost_t         # post_fc, no bias
        outs.append(out)
        segs.append(jnp.mean(xi, axis=0))
        grams.append(attn.T @ attn)
    return jnp.stack(outs), jnp.stack(segs), jnp.stack(grams)


if __name__ == "__main__":
    # Small shapes implied by the module: embedding_size=32, attention_dim=16,
    # attention_head_num=4, segments of lengths [3, 5] -> total frames T=8.
    E, A, H = 32, 16, 4
    seg_lens = jnp.array([3, 5], dtype=jnp.int32)
    T = int(np.sum(np.asarray(seg_lens)))

    key = jax.random.PRNGKey(0)
    kx, k1, k2, k3 = jax.random.split(key, 4)
    x = jax.random.normal(kx, (T, E), dtype=jnp.float32)
    # Weights stored pre-transposed relative to torch.nn.Linear (y = x @ W^T):
    w1 = jax.random.normal(k1, (E, A), dtype=jnp.float32) * 0.1        # Linear(E, A, bias=False)
    w2 = jax.random.normal(k2, (A, H), dtype=jnp.float32) * 0.1        # Linear(A, H, bias=False)
    wpost_t = jax.random.normal(k3, (E * H, E), dtype=jnp.float32) * 0.1  # Linear(E*H, E, bias=False)

    out, out_segment, attn = seq_attention_multi(x, seg_lens, w1, w2, wpost_t)
    jax.block_until_ready((out, out_segment, attn))

    ref_out, ref_seg, ref_attn = _reference(x, seg_lens, w1, w2, wpost_t)
    # bf16 MXU operands vs f32 reference -> bf16-appropriate tolerance.
    assert np.allclose(np.asarray(out), np.asarray(ref_out), atol=3e-2, rtol=3e-2)
    assert np.allclose(np.asarray(out_segment), np.asarray(ref_seg), atol=3e-2, rtol=3e-2)
    assert np.allclose(np.asarray(attn), np.asarray(ref_attn), atol=3e-2, rtol=3e-2)

    print("KERNEL_OK")
</pallas_src>

<mosaic_0001>
module attributes {stable_mosaic.version = 11 : i64} {
  func.func @_seq_att_kernel(%arg0: i32, %arg1: memref<2xi32, #tpu.memory_space<smem>>, %arg2: memref<2xi32, #tpu.memory_space<smem>>, %arg3: memref<8x32xf32, #tpu.memory_space<vmem>>, %arg4: memref<32x16xbf16, #tpu.memory_space<vmem>>, %arg5: memref<16x8xbf16, #tpu.memory_space<vmem>>, %arg6: memref<128x32xbf16, #tpu.memory_space<vmem>>, %arg7: memref<2x128xf32, #tpu.memory_space<vmem>>) attributes {dimension_semantics = [#tpu.dimension_semantics<arbitrary>], iteration_bounds = array<i64: 1>, scalar_prefetch = 2 : i64, scratch_operands = 0 : i64, tpu.core_type = #tpu.core_type<tc>, window_params = [{pipeline_mode = #tpu.pipeline_mode<synchronous>, transform_indices = @transform_0, window_bounds = array<i64: 8, 32>}, {pipeline_mode = #tpu.pipeline_mode<synchronous>, transform_indices = @transform_1, window_bounds = array<i64: 32, 16>}, {pipeline_mode = #tpu.pipeline_mode<synchronous>, transform_indices = @transform_2, window_bounds = array<i64: 16, 8>}, {pipeline_mode = #tpu.pipeline_mode<synchronous>, transform_indices = @transform_3, window_bounds = array<i64: 128, 32>}, {pipeline_mode = #tpu.pipeline_mode<synchronous>, transform_indices = @transform_4, window_bounds = array<i64: 2, 128>}]} {
    %c0 = arith.constant 0 : index
    %c0_0 = arith.constant 0 : index
    %0 = vector.load %arg3[%c0, %c0_0] : memref<8x32xf32, #tpu.memory_space<vmem>>, vector<8x32xf32>
    %1 = arith.truncf %0 : vector<8x32xf32> to vector<8x32xbf16>
    %c0_1 = arith.constant 0 : index
    %c0_2 = arith.constant 0 : index
    %2 = vector.load %arg4[%c0_1, %c0_2] : memref<32x16xbf16, #tpu.memory_space<vmem>>, vector<32x16xbf16>
    %cst = arith.constant dense<0.000000e+00> : vector<8x16xf32>
    %3 = tpu.matmul %1, %2, %cst {dimension_numbers = #tpu.dot_dimension_numbers<[1], [0], [0], [1], [0, 0, 1, 1], [], []>} : vector<8x32xbf16>, vector<32x16xbf16>, vector<8x16xf32> -> vector<8x16xf32>
    %cst_3 = arith.constant 0.000000e+00 : f32
    %4 = vector.broadcast %cst_3 : f32 to vector<8x16xf32>
    %5 = arith.maximumf %3, %4 : vector<8x16xf32>
    %6 = arith.truncf %5 : vector<8x16xf32> to vector<8x16xbf16>
    %c0_4 = arith.constant 0 : index
    %c0_5 = arith.constant 0 : index
    %7 = vector.load %arg5[%c0_4, %c0_5] : memref<16x8xbf16, #tpu.memory_space<vmem>>, vector<16x8xbf16>
    %cst_6 = arith.constant dense<0.000000e+00> : vector<8x8xf32>
    %8 = tpu.matmul %6, %7, %cst_6 {dimension_numbers = #tpu.dot_dimension_numbers<[1], [0], [0], [1], [0, 0, 1, 1], [], []>} : vector<8x16xbf16>, vector<16x8xbf16>, vector<8x8xf32> -> vector<8x8xf32>
    %9 = tpu.iota {dimensions = array<i32: 0>} : vector<8x8xi32>
    %10 = tpu.iota {dimensions = array<i32: 1>} : vector<8x8xi32>
    %c0_7 = arith.constant 0 : index
    %11 = memref.load %arg1[%c0_7] : memref<2xi32, #tpu.memory_space<smem>>
    %12 = vector.broadcast %11 : i32 to vector<8x8xi32>
    %c0_8 = arith.constant 0 : index
    %13 = memref.load %arg2[%c0_8] : memref<2xi32, #tpu.memory_space<smem>>
    %14 = vector.broadcast %13 : i32 to vector<8x8xi32>
    %c4_i32 = arith.constant 4 : i32
    %15 = vector.broadcast %c4_i32 : i32 to vector<8x8xi32>
    %16 = arith.cmpi sge, %10, %15 : vector<8x8xi32>
    %c1 = arith.constant 1 : index
    %17 = memref.load %arg1[%c1] : memref<2xi32, #tpu.memory_space<smem>>
    %18 = vector.broadcast %17 : i32 to vector<8x8xi32>
    %19 = arith.select %16, %18, %12 : vector<8x8xi1>, vector<8x8xi32>
    %c1_9 = arith.constant 1 : index
    %20 = memref.load %arg2[%c1_9] : memref<2xi32, #tpu.memory_space<smem>>
    %21 = vector.broadcast %20 : i32 to vector<8x8xi32>
    %22 = arith.select %16, %21, %14 : vector<8x8xi1>, vector<8x8xi32>
    %23 = arith.cmpi sge, %9, %19 : vector<8x8xi32>
    %24 = arith.addi %19, %22 : vector<8x8xi32>
    %25 = arith.cmpi slt, %9, %24 : vector<8x8xi32>
    %26 = arith.andi %23, %25 : vector<8x8xi1>
    %cst_10 = arith.constant -1.000000e+30 : f32
    %27 = vector.broadcast %cst_10 : f32 to vector<8x8xf32>
    %28 = arith.select %26, %8, %27 : vector<8x8xi1>, vector<8x8xf32>
    %cst_11 = arith.constant dense<0xFF800000> : vector<8xf32>
    %29 = vector.multi_reduction <maximumf>, %28, %cst_11 [0] : vector<8x8xf32> to vector<8xf32>
    %30 = vector.shape_cast %29 : vector<8xf32> to vector<1x8xf32>
    %31 = vector.broadcast %30 : vector<1x8xf32> to vector<8x8xf32>
    %32 = arith.subf %28, %31 : vector<8x8xf32>
    %33 = math.exp %32 : vector<8x8xf32>
    %cst_12 = arith.constant 0.000000e+00 : f32
    %34 = vector.broadcast %cst_12 : f32 to vector<8x8xf32>
    %35 = arith.select %26, %33, %34 : vector<8x8xi1>, vector<8x8xf32>
    %cst_13 = arith.constant dense<0.000000e+00> : vector<8xf32>
    %36 = vector.multi_reduction <add>, %35, %cst_13 [0] : vector<8x8xf32> to vector<8xf32>
    %37 = vector.shape_cast %36 : vector<8xf32> to vector<1x8xf32>
    %cst_14 = arith.constant 1.000000e-30 : f32
    %38 = vector.broadcast %cst_14 : f32 to vector<1x8xf32>
    %39 = arith.maximumf %37, %38 : vector<1x8xf32>
    %40 = tpu.reciprocal %39 {approx = true} : vector<1x8xf32> -> vector<1x8xf32>
    %41 = vector.broadcast %40 : vector<1x8xf32> to vector<8x8xf32>
    %42 = arith.mulf %35, %41 : vector<8x8xf32>
    %43 = arith.truncf %42 : vector<8x8xf32> to vector<8x8xbf16>
    %cst_15 = arith.constant dense<0.000000e+00> : vector<8x32xf32>
    %44 = tpu.matmul %43, %1, %cst_15 {dimension_numbers = #tpu.dot_dimension_numbers<[0], [0], [1], [1], [0, 1, 1, 1], [], []>} : vector<8x8xbf16>, vector<8x32xbf16>, vector<8x32xf32> -> vector<8x32xf32>
    %cst_16 = arith.constant dense<0.000000e+00> : vector<8x8xf32>
    %45 = tpu.matmul %43, %43, %cst_16 {dimension_numbers = #tpu.dot_dimension_numbers<[0], [0], [1], [1], [0, 1, 1, 1], [], []>} : vector<8x8xbf16>, vector<8x8xbf16>, vector<8x8xf32> -> vector<8x8xf32>
    %46 = tpu.iota {dimensions = array<i32: 0>} : vector<2x8xi32>
    %47 = tpu.iota {dimensions = array<i32: 1>} : vector<2x8xi32>
    %c0_17 = arith.constant 0 : index
    %48 = memref.load %arg1[%c0_17] : memref<2xi32, #tpu.memory_space<smem>>
    %49 = vector.broadcast %48 : i32 to vector<2x8xi32>
    %c0_18 = arith.constant 0 : index
    %50 = memref.load %arg2[%c0_18] : memref<2xi32, #tpu.memory_space<smem>>
    %51 = vector.broadcast %50 : i32 to vector<2x8xi32>
    %c0_19 = arith.constant 0 : index
    %52 = memref.load %arg2[%c0_19] : memref<2xi32, #tpu.memory_space<smem>>
    %53 = arith.sitofp %52 : i32 to f32
    %cst_20 = arith.constant 1.000000e+00 : f32
    %54 = arith.maximumf %53, %cst_20 : f32
    %cst_21 = arith.constant 1.000000e+00 : f32
    %55 = arith.divf %cst_21, %54 : f32
    %56 = vector.broadcast %55 : f32 to vector<2x8xf32>
    %c1_i32 = arith.constant 1 : i32
    %57 = vector.broadcast %c1_i32 : i32 to vector<2x8xi32>
    %58 = arith.cmpi eq, %46, %57 : vector<2x8xi32>
    %c1_22 = arith.constant 1 : index
    %59 = memref.load %arg1[%c1_22] : memref<2xi32, #tpu.memory_space<smem>>
    %60 = vector.broadcast %59 : i32 to vector<2x8xi32>
    %61 = arith.select %58, %60, %49 : vector<2x8xi1>, vector<2x8xi32>
    %c1_23 = arith.constant 1 : index
    %62 = memref.load %arg2[%c1_23] : memref<2xi32, #tpu.memory_space<smem>>
    %63 = vector.broadcast %62 : i32 to vector<2x8xi32>
    %64 = arith.select %58, %63, %51 : vector<2x8xi1>, vector<2x8xi32>
    %c1_24 = arith.constant 1 : index
    %65 = memref.load %arg2[%c1_24] : memref<2xi32, #tpu.memory_space<smem>>
    %66 = arith.sitofp %65 : i32 to f32
    %cst_25 = arith.constant 1.000000e+00 : f32
    %67 = arith.maximumf %66, %cst_25 : f32
    %cst_26 = arith.constant 1.000000e+00 : f32
    %68 = arith.divf %cst_26, %67 : f32
    %69 = vector.broadcast %68 : f32 to vector<2x8xf32>
    %70 = arith.select %58, %69, %56 : vector<2x8xi1>, vector<2x8xf32>
    %71 = arith.cmpi sge, %47, %61 : vector<2x8xi32>
    %72 = arith.addi %61, %64 : vector<2x8xi32>
    %73 = arith.cmpi slt, %47, %72 : vector<2x8xi32>
    %74 = arith.andi %71, %73 : vector<2x8xi1>
    %cst_27 = arith.constant 0.000000e+00 : f32
    %75 = vector.broadcast %cst_27 : f32 to vector<2x8xf32>
    %76 = arith.select %74, %70, %75 : vector<2x8xi1>, vector<2x8xf32>
    %cst_28 = arith.constant dense<0.000000e+00> : vector<2x32xf32>
    %77 = tpu.matmul %76, %0, %cst_28 {dimension_numbers = #tpu.dot_dimension_numbers<[1], [0], [0], [1], [0, 0, 1, 1], [], []>} : vector<2x8xf32>, vector<8x32xf32>, vector<2x32xf32> -> vector<2x32xf32>
    %78 = vector.extract_strided_slice %44 {offsets = [0, 0], sizes = [1, 32], strides = [1, 1]} : vector<8x32xf32> to vector<1x32xf32>
    %79 = vector.extract_strided_slice %44 {offsets = [1, 0], sizes = [1, 32], strides = [1, 1]} : vector<8x32xf32> to vector<1x32xf32>
    %80 = vector.extract_strided_slice %44 {offsets = [2, 0], sizes = [1, 32], strides = [1, 1]} : vector<8x32xf32> to vector<1x32xf32>
    %81 = vector.extract_strided_slice %44 {offsets = [3, 0], sizes = [1, 32], strides = [1, 1]} : vector<8x32xf32> to vector<1x32xf32>
    %82 = tpu.concatenate %78, %79, %80, %81 in 1 : vector<1x32xf32>, vector<1x32xf32>, vector<1x32xf32>, vector<1x32xf32> -> vector<1x128xf32>
    %83 = vector.extract_strided_slice %44 {offsets = [4, 0], sizes = [1, 32], strides = [1, 1]} : vector<8x32xf32> to vector<1x32xf32>
    %84 = vector.extract_strided_slice %44 {offsets = [5, 0], sizes = [1, 32], strides = [1, 1]} : vector<8x32xf32> to vector<1x32xf32>
    %85 = vector.extract_strided_slice %44 {offsets = [6, 0], sizes = [1, 32], strides = [1, 1]} : vector<8x32xf32> to vector<1x32xf32>
    %86 = vector.extract_strided_slice %44 {offsets = [7, 0], sizes = [1, 32], strides = [1, 1]} : vector<8x32xf32> to vector<1x32xf32>
    %87 = tpu.concatenate %83, %84, %85, %86 in 1 : vector<1x32xf32>, vector<1x32xf32>, vector<1x32xf32>, vector<1x32xf32> -> vector<1x128xf32>
    %88 = tpu.concatenate %82, %87 in 0 : vector<1x128xf32>, vector<1x128xf32> -> vector<2x128xf32>
    %89 = arith.truncf %88 : vector<2x128xf32> to vector<2x128xbf16>
    %c0_29 = arith.constant 0 : index
    %c0_30 = arith.constant 0 : index
    %90 = vector.load %arg6[%c0_29, %c0_30] : memref<128x32xbf16, #tpu.memory_space<vmem>>, vector<128x32xbf16>
    %cst_31 = arith.constant dense<0.000000e+00> : vector<2x32xf32>
    %91 = tpu.matmul %89, %90, %cst_31 {dimension_numbers = #tpu.dot_dimension_numbers<[1], [0], [0], [1], [0, 0, 1, 1], [], []>} : vector<2x128xbf16>, vector<128x32xbf16>, vector<2x32xf32> -> vector<2x32xf32>
    %92 = vector.extract_strided_slice %45 {offsets = [0, 0], sizes = [1, 4], strides = [1, 1]} : vector<8x8xf32> to vector<1x4xf32>
    %93 = vector.extract_strided_slice %45 {offsets = [1, 0], sizes = [1, 4], strides = [1, 1]} : vector<8x8xf32> to vector<1x4xf32>
    %94 = vector.extract_strided_slice %45 {offsets = [2, 0], sizes = [1, 4], strides = [1, 1]} : vector<8x8xf32> to vector<1x4xf32>
    %95 = vector.extract_strided_slice %45 {offsets = [3, 0], sizes = [1, 4], strides = [1, 1]} : vector<8x8xf32> to vector<1x4xf32>
    %96 = tpu.concatenate %92, %93, %94, %95 in 1 : vector<1x4xf32>, vector<1x4xf32>, vector<1x4xf32>, vector<1x4xf32> -> vector<1x16xf32>
    %97 = vector.extract_strided_slice %45 {offsets = [4, 4], sizes = [1, 4], strides = [1, 1]} : vector<8x8xf32> to vector<1x4xf32>
    %98 = vector.extract_strided_slice %45 {offsets = [5, 4], sizes = [1, 4], strides = [1, 1]} : vector<8x8xf32> to vector<1x4xf32>
    %99 = vector.extract_strided_slice %45 {offsets = [6, 4], sizes = [1, 4], strides = [1, 1]} : vector<8x8xf32> to vector<1x4xf32>
    %100 = vector.extract_strided_slice %45 {offsets = [7, 4], sizes = [1, 4], strides = [1, 1]} : vector<8x8xf32> to vector<1x4xf32>
    %101 = tpu.concatenate %97, %98, %99, %100 in 1 : vector<1x4xf32>, vector<1x4xf32>, vector<1x4xf32>, vector<1x4xf32> -> vector<1x16xf32>
    %102 = tpu.concatenate %96, %101 in 0 : vector<1x16xf32>, vector<1x16xf32> -> vector<2x16xf32>
    %cst_32 = arith.constant 0.000000e+00 : f32
    %103 = vector.broadcast %cst_32 : f32 to vector<2x48xf32>
    %104 = tpu.concatenate %91, %77, %102, %103 in 1 : vector<2x32xf32>, vector<2x32xf32>, vector<2x16xf32>, vector<2x48xf32> -> vector<2x128xf32>
    %c0_33 = arith.constant 0 : index
    %c0_34 = arith.constant 0 : index
    %105 = vector.load %arg7[%c0_33, %c0_34] : memref<2x128xf32, #tpu.memory_space<vmem>>, vector<2x128xf32>
    tpu.vector_store %arg7[%c0_33, %c0_34], %104 {strides = array<i32>} : memref<2x128xf32, #tpu.memory_space<vmem>>, vector<2x128xf32>,
    return
  }
  func.func @transform_0(%arg0: i32, %arg1: memref<2xi32, #tpu.memory_space<smem>>, %arg2: memref<2xi32, #tpu.memory_space<smem>>) -> (i32, i32) {
    %c0_i32 = arith.constant 0 : i32
    %c0_i32_0 = arith.constant 0 : i32
    %c0_i32_1 = arith.constant 0 : i32
    return %c0_i32, %c0_i32_0 : i32, i32
  }
  func.func @transform_1(%arg0: i32, %arg1: memref<2xi32, #tpu.memory_space<smem>>, %arg2: memref<2xi32, #tpu.memory_space<smem>>) -> (i32, i32) {
    %c0_i32 = arith.constant 0 : i32
    %c0_i32_0 = arith.constant 0 : i32
    %c0_i32_1 = arith.constant 0 : i32
    return %c0_i32, %c0_i32_0 : i32, i32
  }
  func.func @transform_2(%arg0: i32, %arg1: memref<2xi32, #tpu.memory_space<smem>>, %arg2: memref<2xi32, #tpu.memory_space<smem>>) -> (i32, i32) {
    %c0_i32 = arith.constant 0 : i32
    %c0_i32_0 = arith.constant 0 : i32
    %c0_i32_1 = arith.constant 0 : i32
    return %c0_i32, %c0_i32_0 : i32, i32
  }
  func.func @transform_3(%arg0: i32, %arg1: memref<2xi32, #tpu.memory_space<smem>>, %arg2: memref<2xi32, #tpu.memory_space<smem>>) -> (i32, i32) {
    %c0_i32 = arith.constant 0 : i32
    %c0_i32_0 = arith.constant 0 : i32
    %c0_i32_1 = arith.constant 0 : i32
    return %c0_i32, %c0_i32_0 : i32, i32
  }
  func.func @transform_4(%arg0: i32, %arg1: memref<2xi32, #tpu.memory_space<smem>>, %arg2: memref<2xi32, #tpu.memory_space<smem>>) -> (i32, i32) {
    %c0_i32 = arith.constant 0 : i32
    %c0_i32_0 = arith.constant 0 : i32
    %c0_i32_1 = arith.constant 0 : i32
    return %c0_i32, %c0_i32_0 : i32, i32
  }
}

</mosaic_0001>

<llo_original>
// kernel: tpu_custom_call.1
$region0: #{tpu_custom_call.1}
  #allocation0 [shape = 'u32[]', space=smem, size = 0x4, offset = 0x4, fixed_abs, tag = 'smem constant byte address 0x4 - core index']
  #allocation1 [shape = 'u32[144,128]{1,0:T(1,128)}', space=vmem, size = 0x12000, scoped, tag = 'internal scratch']
  #allocation2 [shape = 's32[1]{0}', space=sflag, size = 0x4, scoped, tag = 'scoped memory for tpu_custom_call.1']
  #allocation3 [shape = 'u8[512]{0}', space=smem, size = 0x200, scoped, tag = 'prefetched SMEM operand 0']
  #allocation4 [shape = 'u8[512]{0}', space=smem, size = 0x200, scoped, tag = 'prefetched SMEM operand 1']
  %s0 = inlined_call_operand.vmem [shape: s32[2], index: 0, kind: input, shape index: {}]
  %s1 = inlined_call_operand.vmem [shape: s32[2], index: 1, kind: input, shape index: {}]
  %s2 = inlined_call_operand.vmem [shape: f32[8,32], index: 2, kind: input, shape index: {}]
  %s3 = inlined_call_operand.vmem [shape: bf16[32,16], index: 3, kind: input, shape index: {}]
  %s4 = inlined_call_operand.vmem [shape: bf16[16,8], index: 4, kind: input, shape index: {}]
  %s5 = inlined_call_operand.vmem [shape: bf16[128,32], index: 5, kind: input, shape index: {}]
  %s6 = inlined_call_operand.hbm [shape: f32[2,128], index: 6, kind: output, shape index: {}]
  %s7 = sld [smem:[#allocation0]]
  $region26: #{tpu_custom_call.1} parent=0
    _
  %s9 = ssub.s32 1, %s7
  %s10 = scalar_select 0, %s9, %s7
  %s11 = sshll.u32 %s0, 4
  %s12 = int_to_ptr.vmem [resolvable:$true] %s11
  %14 = dma.vmem_to_smem %s12, 16, [#allocation3], [#allocation2]
  %s15 = sshll.u32 %s1, 4
  %s16 = int_to_ptr.vmem [resolvable:$true] %s15
  %18 = dma.vmem_to_smem %s16, 16, [#allocation4], [#allocation2]
  %19 = dma.done [#allocation2], 32
  %20 = sfence
  $region1: #{tpu_custom_call.1} parent=0
    #allocation5 [shape = 'u8[1024]{0}', space=vmem, size = 0x400, scoped, tag = 'output window, operand 0, single buffered']
    #allocation6 [shape = 's32[1]{0}', space=sflag, size = 0x4, scoped, tag = 'scoped memory for tpu_custom_call.1']
    %21 = vsyncpa [#allocation6], 0
    // Predicated region
    $region2: #{tpu_custom_call.1} parent=1 // pred_check
      _
    $region3: #{tpu_custom_call.1} parent=1 // pred_check_branch
      %23 = sbr.rel (0) target = $region5
    $region4: #{tpu_custom_call.1} parent=1 // pred_region
      _
    $region5: #{tpu_custom_call.1} parent=1 // pred_fallthru
      _
    // Predicated region
    $region6: #{tpu_custom_call.1} parent=1 // pred_check
      _
    $region7: #{tpu_custom_call.1} parent=1 // pred_check_branch
      %25 = sbr.rel (0) target = $region9
    $region8: #{tpu_custom_call.1} parent=1 // pred_region
      _
    $region9: #{tpu_custom_call.1} parent=1 // pred_fallthru
      _
    // Predicated region
    $region10: #{tpu_custom_call.1} parent=1 // pred_check
      _
    $region11: #{tpu_custom_call.1} parent=1 // pred_check_branch
      %27 = sbr.rel (0) target = $region13
    $region12: #{tpu_custom_call.1} parent=1 // pred_region
      _
    $region13: #{tpu_custom_call.1} parent=1 // pred_fallthru
      _
    // Predicated region
    $region14: #{tpu_custom_call.1} parent=1 // pred_check
      _
    $region15: #{tpu_custom_call.1} parent=1 // pred_check_branch
      %29 = sbr.rel (0) target = $region17
    $region16: #{tpu_custom_call.1} parent=1 // pred_region
      _
    $region17: #{tpu_custom_call.1} parent=1 // pred_fallthru
      _
    %v31 = vld [vmem:[%s2] sm:$0xff]
    %v32 = vpack.c.bf16 %v31, %v31
    %v33 = vld [vmem:[%s3] sm:$0xf]
    %v34 = vld [vmem:[%s3 + $0x4] sm:$0xf]
    %v35 = vld [vmem:[%s3 + $0x8] sm:$0xf]
    %v36 = vld [vmem:[%s3 + $0xc] sm:$0xf]
    %v41 = vunpack.c.l.b16 %v33
    %v42 = vunpack.c.l.b16 %v34
    %v43 = vunpack.c.l.b16 %v35
    %v44 = vunpack.c.l.b16 %v36
    %v45 = vpack.c.b16 %v42, %v41
    %v46 = vpack.c.b16 %v44, %v43
    %vm49 = vcmask 261120
    %v51 = vsel %vm49, %v32, 0
    %53 = vmatprep.subr.bf16.mxu0 0
    %54 = vmatpush1.bf16.msra.mxu0 0
    %55 = vmatprep.subr.bf16.mxu0 0
    %56 = vmatpush1.bf16.msra.mxu0 0
    %57 = vmatprep.subr.bf16.mxu0 0
    %58 = vmatpush1.bf16.msra.mxu0 0
    %59 = vmatprep.subr.bf16.mxu0 0
    %60 = vmatpush1.bf16.msra.mxu0 0
    %61 = vmatprep.subr.bf16.mxu0 0
    %62 = vmatpush1.bf16.msra.mxu0 0
    %63 = vmatprep.subr.bf16.mxu0 0
    %64 = vmatpush1.bf16.msra.mxu0 0
    %65 = vmatprep.subr.bf16.mxu0 0
    %66 = vmatpush1.bf16.msra.mxu0 %v46
    %67 = vmatprep.subr.bf16.mxu0 0
    %68 = vmatpush1.bf16.msra.mxu0 %v45
    %69 = vmatprep.subr.bf16.mxu0 0
    %70 = vmatpush2.bf16.msra.mxu0 0
    %71 = vmatprep.subr.bf16.mxu0 0
    %72 = vmatpush2.bf16.msra.mxu0 0
    %73 = vmatprep.subr.bf16.mxu0 0
    %74 = vmatpush2.bf16.msra.mxu0 0
    %75 = vmatprep.subr.bf16.mxu0 0
    %76 = vmatpush2.bf16.msra.mxu0 0
    %77 = vmatprep.subr.bf16.mxu0 0
    %78 = vmatpush2.bf16.msra.mxu0 0
    %79 = vmatprep.subr.bf16.mxu0 0
    %80 = vmatpush2.bf16.msra.mxu0 0
    %81 = vmatprep.subr.bf16.mxu0 0
    %82 = vmatpush2.bf16.msra.mxu0 0
    %83 = vmatprep.subr.bf16.mxu0 0
    %84 = vmatpush2.bf16.msra.mxu0 0
    %85 = vmatprep.mubr.bf16.mxu0 0
    %86 = vmatmul.mubr.bf16.gmra.mxu0 %v51
    %v87 = vpop.f32.mrf.mxu0
    %v88 = vadd.f32 0.0, %v87
    %v89 = vpop.f32.mrf.mxu0
    %v90 = vpop.f32.mrf.mxu0
    %v91 = vpop.f32.mrf.mxu0
    %92 = vdwg.mxu0
    %v93 = vmax.f32 %v88, 0.0
    %v94 = vpack.c.bf16 %v93, %v93
    %v95 = vld [vmem:[%s4] sm:$0xf]
    %v96 = vld [vmem:[%s4 + $0x4] sm:$0xf]
    %v99 = vunpack.c.l.b16 %v95
    %v100 = vunpack.c.l.b16 %v96
    %v101 = vpack.c.b16 %v100, %v99
    %vm103 = vcmask 130048
    %v105 = vsel %vm103, %v94, 0
    %107 = vmatprep.subr.bf16.mxu0 0
    %108 = vmatpush1.bf16.msra.mxu0 0
    %109 = vmatprep.subr.bf16.mxu0 0
    %110 = vmatpush1.bf16.msra.mxu0 0
    %111 = vmatprep.subr.bf16.mxu0 0
    %112 = vmatpush1.bf16.msra.mxu0 0
    %113 = vmatprep.subr.bf16.mxu0 0
    %114 = vmatpush1.bf16.msra.mxu0 0
    %115 = vmatprep.subr.bf16.mxu0 0
    %116 = vmatpush1.bf16.msra.mxu0 0
    %117 = vmatprep.subr.bf16.mxu0 0
    %118 = vmatpush1.bf16.msra.mxu0 0
    %119 = vmatprep.subr.bf16.mxu0 0
    %120 = vmatpush1.bf16.msra.mxu0 0
    %121 = vmatprep.subr.bf16.mxu0 0
    %122 = vmatpush1.bf16.msra.mxu0 %v101
    %123 = vmatprep.subr.bf16.mxu0 0
    %124 = vmatpush2.bf16.msra.mxu0 0
    %125 = vmatprep.subr.bf16.mxu0 0
    %126 = vmatpush2.bf16.msra.mxu0 0
    %127 = vmatprep.subr.bf16.mxu0 0
    %128 = vmatpush2.bf16.msra.mxu0 0
    %129 = vmatprep.subr.bf16.mxu0 0
    %130 = vmatpush2.bf16.msra.mxu0 0
    %131 = vmatprep.subr.bf16.mxu0 0
    %132 = vmatpush2.bf16.msra.mxu0 0
    %133 = vmatprep.subr.bf16.mxu0 0
    %134 = vmatpush2.bf16.msra.mxu0 0
    %135 = vmatprep.subr.bf16.mxu0 0
    %136 = vmatpush2.bf16.msra.mxu0 0
    %137 = vmatprep.subr.bf16.mxu0 0
    %138 = vmatpush2.bf16.msra.mxu0 0
    %139 = vmatprep.mubr.bf16.mxu0 0
    %140 = vmatmul.mubr.bf16.gmra.mxu0 %v105
    %v141 = vpop.f32.mrf.mxu0
    %v142 = vadd.f32 0.0, %v141
    %v143 = vpop.f32.mrf.mxu0
    %v144 = vpop.f32.mrf.mxu0
    %v145 = vpop.f32.mrf.mxu0
    %146 = vdwg.mxu0
    %v147 = vlaneseq
    %v148 = vshrl.u32 %v147, 7
    %v149 = vlaneseq
    %v150 = vand.u32 %v149, 127
    %s151 = sld [smem:[#allocation3]]
    %v152 = vstv %s151
    %s153 = sld [smem:[#allocation4]]
    %v154 = vstv %s153
    %vm155 = vcmp.ge.s32.totalorder %v150, 4
    %s156 = sld [smem:[#allocation3 + $0x1]]
    %v157 = vstv %s156
    %v158 = vsel %vm155, %v157, %v152
    %s159 = sld [smem:[#allocation4 + $0x1]]
    %v160 = vstv %s159
    %v161 = vsel %vm155, %v160, %v154
    %vm162 = vcmp.ge.s32.totalorder %v148, %v158
    %v163 = vadd.s32 %v158, %v161
    %vm164 = vcmp.lt.s32.totalorder %v148, %v163
    %vm165 = vmand %vm162, %vm164
    %v166 = vsel %vm165, %v142, -1e+30
    %vm167 = vcmask 64512
    %v168 = vsel %vm167, %v166, -inf
    %v169 = vrot.slane %v168, 4
    %v170 = vmax.f32 %v168, %v169
    %v171 = vrot.slane %v170, 2
    %v172 = vmax.f32 %v170, %v171
    %v173 = vrot.slane %v172, 1
    %v174 = vmax.f32 %v172, %v173
    %v175 = vsub.f32 %v166, %v174
    %v176 = vmul.f32 %v175, 1.442695
    %v177 = vpow.pop %v176
    %v178 = vsel %vm165, %v177, 0.0
    %v179 = vsel %vm167, %v178, 0.0
    %v180 = vrot.slane %v179, 4
    %v181 = vadd.f32 %v179, %v180
    %v182 = vrot.slane %v181, 2
    %v183 = vadd.f32 %v181, %v182
    %v184 = vrot.slane %v183, 1
    %v185 = vadd.f32 %v183, %v184
    %v186 = vmax.f32 %v185, 1e-30
    %v187 = vrcp.pop %v186
    %v188 = vmul.f32 %v178, %v187
    %v189 = vpack.c.bf16 %v188, %v188
    %190 = vxpose.xlu0.c.b16.start [1/8] %v189, 128
    %191 = vxpose.xlu0.c.b16.cont [2/8] 0, 128
    %192 = vxpose.xlu0.c.b16.cont [3/8] 0, 128
    %193 = vxpose.xlu0.c.b16.cont [4/8] 0, 128
    %194 = vxpose.xlu0.c.b16.cont [5/8] 0, 128
    %195 = vxpose.xlu0.c.b16.cont [6/8] 0, 128
    %196 = vxpose.xlu0.c.b16.cont [7/8] 0, 128
    %197 = vxpose.xlu0.c.b16.end [8/8] 0, 128
    %v198 = vpop.trf.xlu0
    %v199 = vpop.trf.xlu0
    %v200 = vpop.trf.xlu0
    %v201 = vpop.trf.xlu0
    %v202 = vpop.trf.xlu0
    %v203 = vpop.trf.xlu0
    %v204 = vpop.trf.xlu0
    %v205 = vpop.trf.xlu0
    %v207 = vsel %vm167, %v198, 0
    %vm209 = vcmask 1043456
    %v210 = vsel %vm209, %v32, 0
    %212 = vmatprep.subr.bf16.mxu0 0
    %213 = vmatpush1.bf16.msra.mxu0 0
    %214 = vmatprep.subr.bf16.mxu0 0
    %215 = vmatpush1.bf16.msra.mxu0 0
    %216 = vmatprep.subr.bf16.mxu0 0
    %217 = vmatpush1.bf16.msra.mxu0 0
    %218 = vmatprep.subr.bf16.mxu0 0
    %219 = vmatpush1.bf16.msra.mxu0 0
    %220 = vmatprep.subr.bf16.mxu0 0
    %221 = vmatpush1.bf16.msra.mxu0 0
    %222 = vmatprep.subr.bf16.mxu0 0
    %223 = vmatpush1.bf16.msra.mxu0 0
    %224 = vmatprep.subr.bf16.mxu0 0
    %225 = vmatpush1.bf16.msra.mxu0 0
    %226 = vmatprep.subr.bf16.mxu0 0
    %227 = vmatpush1.bf16.msra.mxu0 %v210
    %228 = vmatprep.subr.bf16.mxu0 0
    %229 = vmatpush2.bf16.msra.mxu0 0
    %230 = vmatprep.subr.bf16.mxu0 0
    %231 = vmatpush2.bf16.msra.mxu0 0
    %232 = vmatprep.subr.bf16.mxu0 0
    %233 = vmatpush2.bf16.msra.mxu0 0
    %234 = vmatprep.subr.bf16.mxu0 0
    %235 = vmatpush2.bf16.msra.mxu0 0
    %236 = vmatprep.subr.bf16.mxu0 0
    %237 = vmatpush2.bf16.msra.mxu0 0
    %238 = vmatprep.subr.bf16.mxu0 0
    %239 = vmatpush2.bf16.msra.mxu0 0
    %240 = vmatprep.subr.bf16.mxu0 0
    %241 = vmatpush2.bf16.msra.mxu0 0
    %242 = vmatprep.subr.bf16.mxu0 0
    %243 = vmatpush2.bf16.msra.mxu0 0
    %244 = vmatprep.mubr.bf16.mxu0 0
    %245 = vmatmul.mubr.bf16.gmra.mxu0 %v207
    %v246 = vpop.f32.mrf.mxu0
    %v247 = vadd.f32 0.0, %v246
    %v248 = vpop.f32.mrf.mxu0
    %v249 = vpop.f32.mrf.mxu0
    %v250 = vpop.f32.mrf.mxu0
    %251 = vdwg.mxu0
    %v253 = vsel %vm209, %v189, 0
    %255 = vmatprep.subr.bf16.mxu0 0
    %256 = vmatpush1.bf16.msra.mxu0 0
    %257 = vmatprep.subr.bf16.mxu0 0
    %258 = vmatpush1.bf16.msra.mxu0 0
    %259 = vmatprep.subr.bf16.mxu0 0
    %260 = vmatpush1.bf16.msra.mxu0 0
    %261 = vmatprep.subr.bf16.mxu0 0
    %262 = vmatpush1.bf16.msra.mxu0 0
    %263 = vmatprep.subr.bf16.mxu0 0
    %264 = vmatpush1.bf16.msra.mxu0 0
    %265 = vmatprep.subr.bf16.mxu0 0
    %266 = vmatpush1.bf16.msra.mxu0 0
    %267 = vmatprep.subr.bf16.mxu0 0
    %268 = vmatpush1.bf16.msra.mxu0 0
    %269 = vmatprep.subr.bf16.mxu0 0
    %270 = vmatpush1.bf16.msra.mxu0 %v253
    %271 = vmatprep.subr.bf16.mxu0 0
    %272 = vmatpush2.bf16.msra.mxu0 0
    %273 = vmatprep.subr.bf16.mxu0 0
    %274 = vmatpush2.bf16.msra.mxu0 0
    %275 = vmatprep.subr.bf16.mxu0 0
    %276 = vmatpush2.bf16.msra.mxu0 0
    %277 = vmatprep.subr.bf16.mxu0 0
    %278 = vmatpush2.bf16.msra.mxu0 0
    %279 = vmatprep.subr.bf16.mxu0 0
    %280 = vmatpush2.bf16.msra.mxu0 0
    %281 = vmatprep.subr.bf16.mxu0 0
    %282 = vmatpush2.bf16.msra.mxu0 0
    %283 = vmatprep.subr.bf16.mxu0 0
    %284 = vmatpush2.bf16.msra.mxu0 0
    %285 = vmatprep.subr.bf16.mxu0 0
    %286 = vmatpush2.bf16.msra.mxu0 0
    %287 = vmatprep.mubr.bf16.mxu0 0
    %288 = vmatmul.mubr.bf16.gmra.mxu0 %v207
    %v289 = vpop.f32.mrf.mxu0
    %v290 = vadd.f32 0.0, %v289
    %v291 = vpop.f32.mrf.mxu0
    %v292 = vpop.f32.mrf.mxu0
    %v293 = vpop.f32.mrf.mxu0
    %294 = vdwg.mxu0
    %s295 = scvt.s32.f32 %s153
    %s296 = smax.f32 %s295, 1.0
    %v297 = vstv %s296
    %v298 = vrcp.pop %v297
    %s299 = vtos %v298
    %v300 = vstv %s299
    %vm301 = vcmp.eq.s32.totalorder %v148, 1
    %v302 = vsel %vm301, %v157, %v152
    %v303 = vsel %vm301, %v160, %v154
    %s304 = scvt.s32.f32 %s159
    %s305 = smax.f32 %s304, 1.0
    %v306 = vstv %s305
    %v307 = vrcp.pop %v306
    %s308 = vtos %v307
    %v309 = vstv %s308
    %v310 = vsel %vm301, %v309, %v300
    %vm311 = vcmp.ge.s32.totalorder %v150, %v302
    %v312 = vadd.s32 %v302, %v303
    %vm313 = vcmp.lt.s32.totalorder %v150, %v312
    %vm314 = vmand %vm311, %vm313
    %v315 = vsel %vm314, %v310, 0.0
    %v317 = vsel %vm167, %v315, 0
    %319 = vmatprep.subr.mxu0 0.0
    %320 = vmatpush1.msra.mxu0 0.0
    %321 = vmatprep.subr.mxu0 0.0
    %322 = vmatpush1.msra.mxu0 0.0
    %323 = vmatprep.subr.mxu0 0.0
    %324 = vmatpush1.msra.mxu0 0.0
    %325 = vmatprep.subr.mxu0 0.0
    %326 = vmatpush1.msra.mxu0 0.0
    %327 = vmatprep.subr.mxu0 0.0
    %328 = vmatpush1.msra.mxu0 0.0
    %329 = vmatprep.subr.mxu0 0.0
    %330 = vmatpush1.msra.mxu0 0.0
    %331 = vmatprep.subr.mxu0 0.0
    %332 = vmatpush1.msra.mxu0 0.0
    %333 = vmatprep.subr.mxu0 0.0
    %334 = vmatpush1.msra.mxu0 0.0
    %335 = vmatprep.subr.mxu0 0.0
    %336 = vmatpush1.msra.mxu0 0.0
    %337 = vmatprep.subr.mxu0 0.0
    %338 = vmatpush1.msra.mxu0 0.0
    %339 = vmatprep.subr.mxu0 0.0
    %340 = vmatpush1.msra.mxu0 0.0
    %341 = vmatprep.subr.mxu0 0.0
    %342 = vmatpush1.msra.mxu0 0.0
    %343 = vmatprep.subr.mxu0 0.0
    %344 = vmatpush1.msra.mxu0 0.0
    %345 = vmatprep.subr.mxu0 0.0
    %346 = vmatpush1.msra.mxu0 0.0
    %347 = vmatprep.subr.mxu0 0.0
    %348 = vmatpush1.msra.mxu0 0.0
    %349 = vmatprep.subr.mxu0 0.0
    %350 = vmatpush1.msra.mxu0 %v31
    %351 = vmatprep.subr.mxu0 0.0
    %352 = vmatpush2.msra.mxu0 0.0
    %353 = vmatprep.subr.mxu0 0.0
    %354 = vmatpush2.msra.mxu0 0.0
    %355 = vmatprep.subr.mxu0 0.0
    %356 = vmatpush2.msra.mxu0 0.0
    %357 = vmatprep.subr.mxu0 0.0
    %358 = vmatpush2.msra.mxu0 0.0
    %359 = vmatprep.subr.mxu0 0.0
    %360 = vmatpush2.msra.mxu0 0.0
    %361 = vmatprep.subr.mxu0 0.0
    %362 = vmatpush2.msra.mxu0 0.0
    %363 = vmatprep.subr.mxu0 0.0
    %364 = vmatpush2.msra.mxu0 0.0
    %365 = vmatprep.subr.mxu0 0.0
    %366 = vmatpush2.msra.mxu0 0.0
    %367 = vmatprep.subr.mxu0 0.0
    %368 = vmatpush2.msra.mxu0 0.0
    %369 = vmatprep.subr.mxu0 0.0
    %370 = vmatpush2.msra.mxu0 0.0
    %371 = vmatprep.subr.mxu0 0.0
    %372 = vmatpush2.msra.mxu0 0.0
    %373 = vmatprep.subr.mxu0 0.0
    %374 = vmatpush2.msra.mxu0 0.0
    %375 = vmatprep.subr.mxu0 0.0
    %376 = vmatpush2.msra.mxu0 0.0
    %377 = vmatprep.subr.mxu0 0.0
    %378 = vmatpush2.msra.mxu0 0.0
    %379 = vmatprep.subr.mxu0 0.0
    %380 = vmatpush2.msra.mxu0 0.0
    %381 = vmatprep.subr.mxu0 0.0
    %382 = vmatpush2.msra.mxu0 0.0
    %383 = vmatprep.mubr.f32.mxu0 0.0
    %384 = vmatmul.mubr.f32.gmra.mxu0 %v317
    %v385 = vpop.f32.mrf.mxu0
    %v386 = vadd.f32 0.0, %v385
    %v387 = vpop.f32.mrf.mxu0
    %388 = vdwg.mxu0
    %v390 = vrot.slane %v247, 1
    %391 = vrot.lane.b32.xlu0 %v390, 32
    %v392 = vpop.permute.xlu0 %391
    %v394 = vrot.slane %v247, 2
    %395 = vrot.lane.b32.xlu0 %v394, 64
    %v396 = vpop.permute.xlu0 %395
    %v398 = vrot.slane %v247, 3
    %399 = vrot.lane.b32.xlu0 %v398, 96
    %v400 = vpop.permute.xlu0 %399
    %v402 = vsel %vm49, %v247, %v392
    %vm403 = vcmask 523264
    %v404 = vsel %vm403, %v402, %v396
    %vm405 = vcmask 785408
    %v406 = vsel %vm405, %v404, %v400
    %v408 = vrot.slane %v406, 3
    %vm410 = vcmask 1040384
    %v411 = vsel %vm410, %v406, %v408
    %v412 = vpack.c.bf16 %v411, %v411
    %v413 = vld [vmem:[%s5] sm:$0xf]
    %v414 = vld [vmem:[%s5 + $0x4] sm:$0xf]
    %v415 = vld [vmem:[%s5 + $0x8] sm:$0xf]
    %v416 = vld [vmem:[%s5 + $0xc] sm:$0xf]
    %v417 = vld [vmem:[%s5 + $0x10] sm:$0xf]
    %v418 = vld [vmem:[%s5 + $0x14] sm:$0xf]
    %v419 = vld [vmem:[%s5 + $0x18] sm:$0xf]
    %v420 = vld [vmem:[%s5 + $0x1c] sm:$0xf]
    %v421 = vld [vmem:[%s5 + $0x20] sm:$0xf]
    %v422 = vld [vmem:[%s5 + $0x24] sm:$0xf]
    %v423 = vld [vmem:[%s5 + $0x28] sm:$0xf]
    %v424 = vld [vmem:[%s5 + $0x2c] sm:$0xf]
    %v425 = vld [vmem:[%s5 + $0x30] sm:$0xf]
    %v426 = vld [vmem:[%s5 + $0x34] sm:$0xf]
    %v427 = vld [vmem:[%s5 + $0x38] sm:$0xf]
    %v428 = vld [vmem:[%s5 + $0x3c] sm:$0xf]
    %v445 = vunpack.c.l.b16 %v413
    %v446 = vunpack.c.l.b16 %v414
    %v447 = vunpack.c.l.b16 %v415
    %v448 = vunpack.c.l.b16 %v416
    %v449 = vunpack.c.l.b16 %v417
    %v450 = vunpack.c.l.b16 %v418
    %v451 = vunpack.c.l.b16 %v419
    %v452 = vunpack.c.l.b16 %v420
    %v453 = vunpack.c.l.b16 %v421
    %v454 = vunpack.c.l.b16 %v422
    %v455 = vunpack.c.l.b16 %v423
    %v456 = vunpack.c.l.b16 %v424
    %v457 = vunpack.c.l.b16 %v425
    %v458 = vunpack.c.l.b16 %v426
    %v459 = vunpack.c.l.b16 %v427
    %v460 = vunpack.c.l.b16 %v428
    %v461 = vpack.c.b16 %v446, %v445
    %v462 = vpack.c.b16 %v448, %v447
    %v463 = vpack.c.b16 %v450, %v449
    %v464 = vpack.c.b16 %v452, %v451
    %v465 = vpack.c.b16 %v454, %v453
    %v466 = vpack.c.b16 %v456, %v455
    %v467 = vpack.c.b16 %v458, %v457
    %v468 = vpack.c.b16 %v460, %v459
    %477 = vmatprep.subr.bf16.mxu0 0
    %478 = vmatpush1.bf16.msra.mxu0 %v468
    %479 = vmatprep.subr.bf16.mxu0 0
    %480 = vmatpush1.bf16.msra.mxu0 %v467
    %481 = vmatprep.subr.bf16.mxu0 0
    %482 = vmatpush1.bf16.msra.mxu0 %v466
    %483 = vmatprep.subr.bf16.mxu0 0
    %484 = vmatpush1.bf16.msra.mxu0 %v465
    %485 = vmatprep.subr.bf16.mxu0 0
    %486 = vmatpush1.bf16.msra.mxu0 %v464
    %487 = vmatprep.subr.bf16.mxu0 0
    %488 = vmatpush1.bf16.msra.mxu0 %v463
    %489 = vmatprep.subr.bf16.mxu0 0
    %490 = vmatpush1.bf16.msra.mxu0 %v462
    %491 = vmatprep.subr.bf16.mxu0 0
    %492 = vmatpush1.bf16.msra.mxu0 %v461
    %493 = vmatprep.subr.bf16.mxu0 0
    %494 = vmatpush2.bf16.msra.mxu0 0
    %495 = vmatprep.subr.bf16.mxu0 0
    %496 = vmatpush2.bf16.msra.mxu0 0
    %497 = vmatprep.subr.bf16.mxu0 0
    %498 = vmatpush2.bf16.msra.mxu0 0
    %499 = vmatprep.subr.bf16.mxu0 0
    %500 = vmatpush2.bf16.msra.mxu0 0
    %501 = vmatprep.subr.bf16.mxu0 0
    %502 = vmatpush2.bf16.msra.mxu0 0
    %503 = vmatprep.subr.bf16.mxu0 0
    %504 = vmatpush2.bf16.msra.mxu0 0
    %505 = vmatprep.subr.bf16.mxu0 0
    %506 = vmatpush2.bf16.msra.mxu0 0
    %507 = vmatprep.subr.bf16.mxu0 0
    %508 = vmatpush2.bf16.msra.mxu0 0
    %509 = vmatprep.mubr.bf16.mxu0 0
    %510 = vmatmul.mubr.bf16.gmra.mxu0 %v412
    %v511 = vpop.f32.mrf.mxu0
    %v512 = vadd.f32 0.0, %v511
    %v513 = vpop.f32.mrf.mxu0
    %v514 = vpop.f32.mrf.mxu0
    %v515 = vpop.f32.mrf.mxu0
    %516 = vdwg.mxu0
    %v518 = vrot.slane %v290, 1
    %519 = vrot.lane.b32.xlu0 %v518, 4
    %v520 = vpop.permute.xlu0 %519
    %v522 = vrot.slane %v290, 2
    %523 = vrot.lane.b32.xlu0 %v522, 8
    %v524 = vpop.permute.xlu0 %523
    %v526 = vrot.slane %v290, 3
    %527 = vrot.lane.b32.xlu0 %v526, 12
    %v528 = vpop.permute.xlu0 %527
    %vm530 = vcmask 31744
    %v531 = vsel %vm530, %v290, %v520
    %v532 = vsel %vm167, %v531, %v524
    %vm533 = vcmask 97280
    %v534 = vsel %vm533, %v532, %v528
    %535 = vrot.lane.b32.xlu0 %v290, 124
    %v536 = vpop.permute.xlu0 %535
    %539 = vrot.lane.b32.xlu0 %v522, 4
    %v540 = vpop.permute.xlu0 %539
    %542 = vrot.lane.b32.xlu0 %v526, 8
    %v543 = vpop.permute.xlu0 %542
    %v545 = vsel %vm530, %v536, %v518
    %v546 = vsel %vm167, %v545, %v540
    %v547 = vsel %vm533, %v546, %v543
    %v549 = vrot.slane %v547, 3
    %v551 = vsel %vm410, %v534, %v549
    %553 = vrot.lane.b32.xlu0 %v386, 32
    %v554 = vpop.permute.xlu0 %553
    %557 = vrot.lane.b32.xlu0 %v551, 64
    %v558 = vpop.permute.xlu0 %557
    %v560 = vsel %vm49, %v512, %v554
    %v561 = vsel %vm403, %v560, %v558
    %vm562 = vcmask 654336
    %v563 = vsel %vm562, %v561, 0.0
    %564 = vst [vmem:[#allocation5] sm:$0x3] %v563
    // Predicated region
    $region18: #{tpu_custom_call.1} parent=1 // pred_check
      _
    $region19: #{tpu_custom_call.1} parent=1 // pred_check_branch
      %566 = sbr.rel (0) target = $region21
    $region20: #{tpu_custom_call.1} parent=1 // pred_region
      %s568 = ssub.s32 32, 32
      %569 = vsyncadd [#allocation6], %s568
      %s571 = sshll.u32 [#allocation5], 4
      %s572 = int_to_ptr.vmem [resolvable:$true] %s571
      %574 = dma.vmem_to_hbm [thread:$0]  %s572, 32, %s6, [#allocation6]
    $region21: #{tpu_custom_call.1} parent=1 // pred_fallthru
      _
    // Predicated region
    $region22: #{tpu_custom_call.1} parent=1 // pred_check
      _
    $region23: #{tpu_custom_call.1} parent=1 // pred_check_branch
      %576 = sbr.rel (0) target = $region25
    $region24: #{tpu_custom_call.1} parent=1 // pred_region
      %577 = dma.done [#allocation6], 32
    $region25: #{tpu_custom_call.1} parent=1 // pred_fallthru
      _
    %578 = vsyncpa [#allocation6], 1

</llo_original>
